<compile_context>
chip_gen: v6e
topology: v6e:2x2x1
jax: 0.10.0
libtpu: 0.0.40
codegen_flags: <defaults>
</compile_context>

<pallas_src>
import functools

import jax
import jax.numpy as jnp
from jax.experimental import pallas as pl
from jax.experimental.pallas import tpu as pltpu


def _split_heads_kernel(q_ref, k_ref, v_ref, qo_ref, ko_ref, vo_ref,
                        *, num_heads, d):
    # q_ref: (1, to_num, latent_dim), k_ref/v_ref: (1, from_num, latent_dim)
    # qo_ref: (1, H, to_num, d),      ko_ref/vo_ref: (1, H, from_num, d)
    # Unrolled static loop over heads: each head is a contiguous lane slice
    # [h*d : (h+1)*d] of the dense input block, written directly (no reshape).
    for h in range(num_heads):
        lo = h * d
        qo_ref[0, h] = q_ref[0, :, lo:lo + d]
        ko_ref[0, h] = k_ref[0, :, lo:lo + d]
        vo_ref[0, h] = v_ref[0, :, lo:lo + d]


def split_heads(Q, K, V, num_heads):
    batch_size, to_num, latent_dim = Q.shape
    _, from_num, _ = K.shape
    assert latent_dim % num_heads == 0, "latent_dim must be divisible by num_heads"
    d = latent_dim // num_heads

    grid = (batch_size,)

    # Dense per-batch slabs: one big contiguous DMA per tensor per grid step.
    in_specs = [
        pl.BlockSpec((1, to_num, latent_dim), lambda b: (b, 0, 0)),
        pl.BlockSpec((1, from_num, latent_dim), lambda b: (b, 0, 0)),
        pl.BlockSpec((1, from_num, latent_dim), lambda b: (b, 0, 0)),
    ]
    out_specs = [
        pl.BlockSpec((1, num_heads, to_num, d), lambda b: (b, 0, 0, 0)),
        pl.BlockSpec((1, num_heads, from_num, d), lambda b: (b, 0, 0, 0)),
        pl.BlockSpec((1, num_heads, from_num, d), lambda b: (b, 0, 0, 0)),
    ]
    out_shape = (
        jax.ShapeDtypeStruct((batch_size, num_heads, to_num, d), Q.dtype),
        jax.ShapeDtypeStruct((batch_size, num_heads, from_num, d), K.dtype),
        jax.ShapeDtypeStruct((batch_size, num_heads, from_num, d), V.dtype),
    )

    # Pure data movement: read + write every element of Q, K, V once.
    bytes_accessed = 2 * (
        Q.size * Q.dtype.itemsize
        + K.size * K.dtype.itemsize
        + V.size * V.dtype.itemsize
    )
    cost = pl.CostEstimate(flops=0, transcendentals=0,
                           bytes_accessed=bytes_accessed)

    kernel = functools.partial(_split_heads_kernel, num_heads=num_heads, d=d)

    return pl.pallas_call(
        kernel,
        out_shape=out_shape,
        grid_spec=pltpu.PrefetchScalarGridSpec(
            num_scalar_prefetch=0,
            grid=grid,
            in_specs=in_specs,
            out_specs=out_specs,
        ),
        compiler_params=pltpu.CompilerParams(
            # batch axis is independent -> shard across TensorCores on v7x.
            dimension_semantics=("parallel",),
            # Safe on every generation (v7x physical VMEM is 64 MiB) while
            # allowing large per-batch slabs with double-buffering.
            vmem_limit_bytes=48 * 1024 * 1024,
        ),
        cost_estimate=cost,
    )(Q, K, V)


def _reference_split_heads(Q, K, V, num_heads):
    def split(x):
        b, n, ld = x.shape
        d = ld // num_heads
        return x.reshape(b, n, num_heads, d).transpose(0, 2, 1, 3)
    return split(Q), split(K), split(V)


if __name__ == "__main__":
    # Small, TPU-layout-friendly shapes: d = latent_dim // num_heads = 128
    # so per-head lane slices are vreg-aligned.
    num_heads = 2
    batch = 2
    to_num = 8
    from_num = 16
    latent_dim = 256

    key = jax.random.PRNGKey(0)
    kq, kk, kv = jax.random.split(key, 3)
    Q = jax.random.normal(kq, (batch, to_num, latent_dim), dtype=jnp.float32)
    K = jax.random.normal(kk, (batch, from_num, latent_dim), dtype=jnp.float32)
    V = jax.random.normal(kv, (batch, from_num, latent_dim), dtype=jnp.float32)

    q_out, k_out, v_out = split_heads(Q, K, V, num_heads)
    jax.block_until_ready((q_out, k_out, v_out))

    q_ref, k_ref, v_ref = _reference_split_heads(Q, K, V, num_heads)
    assert q_out.shape == (batch, num_heads, to_num, latent_dim // num_heads)
    assert k_out.shape == (batch, num_heads, from_num, latent_dim // num_heads)
    assert v_out.shape == (batch, num_heads, from_num, latent_dim // num_heads)
    assert jnp.array_equal(q_out, q_ref)
    assert jnp.array_equal(k_out, k_ref)
    assert jnp.array_equal(v_out, v_ref)

    print("KERNEL_OK")
</pallas_src>

<mosaic_0001>
module attributes {stable_mosaic.version = 11 : i64} {
  func.func @_split_heads_kernel(%arg0: i32, %arg1: memref<1x8x256xf32, #tpu.memory_space<vmem>>, %arg2: memref<1x16x256xf32, #tpu.memory_space<vmem>>, %arg3: memref<1x16x256xf32, #tpu.memory_space<vmem>>, %arg4: memref<1x2x8x128xf32, #tpu.memory_space<vmem>>, %arg5: memref<1x2x16x128xf32, #tpu.memory_space<vmem>>, %arg6: memref<1x2x16x128xf32, #tpu.memory_space<vmem>>) attributes {dimension_semantics = [#tpu.dimension_semantics<parallel>], iteration_bounds = array<i64: 2>, scalar_prefetch = 0 : i64, scratch_operands = 0 : i64, tpu.core_type = #tpu.core_type<tc>, window_params = [{transform_indices = @transform_0, window_bounds = array<i64: 1, 8, 256>}, {transform_indices = @transform_1, window_bounds = array<i64: 1, 16, 256>}, {transform_indices = @transform_2, window_bounds = array<i64: 1, 16, 256>}, {transform_indices = @transform_3, window_bounds = array<i64: 1, 2, 8, 128>}, {transform_indices = @transform_4, window_bounds = array<i64: 1, 2, 16, 128>}, {transform_indices = @transform_5, window_bounds = array<i64: 1, 2, 16, 128>}]} {
    %c0 = arith.constant 0 : index
    %c0_0 = arith.constant 0 : index
    %c0_1 = arith.constant 0 : index
    %0 = vector.load %arg1[%c0, %c0_0, %c0_1] : memref<1x8x256xf32, #tpu.memory_space<vmem>>, vector<1x8x128xf32>
    %1 = vector.shape_cast %0 : vector<1x8x128xf32> to vector<8x128xf32>
    %c0_2 = arith.constant 0 : index
    %c0_3 = arith.constant 0 : index
    %c0_4 = arith.constant 0 : index
    %c0_5 = arith.constant 0 : index
    %2 = vector.load %arg4[%c0_2, %c0_3, %c0_4, %c0_5] : memref<1x2x8x128xf32, #tpu.memory_space<vmem>>, vector<1x1x8x128xf32>
    %3 = vector.shape_cast %2 : vector<1x1x8x128xf32> to vector<8x128xf32>
    %4 = vector.shape_cast %1 : vector<8x128xf32> to vector<1x1x8x128xf32>
    tpu.vector_store %arg4[%c0_2, %c0_3, %c0_4, %c0_5], %4 {strides = array<i32>} : memref<1x2x8x128xf32, #tpu.memory_space<vmem>>, vector<1x1x8x128xf32>,
    %c0_6 = arith.constant 0 : index
    %c0_7 = arith.constant 0 : index
    %c0_8 = arith.constant 0 : index
    %5 = vector.load %arg2[%c0_6, %c0_7, %c0_8] : memref<1x16x256xf32, #tpu.memory_space<vmem>>, vector<1x16x128xf32>
    %6 = vector.shape_cast %5 : vector<1x16x128xf32> to vector<16x128xf32>
    %c0_9 = arith.constant 0 : index
    %c0_10 = arith.constant 0 : index
    %c0_11 = arith.constant 0 : index
    %c0_12 = arith.constant 0 : index
    %7 = vector.load %arg5[%c0_9, %c0_10, %c0_11, %c0_12] : memref<1x2x16x128xf32, #tpu.memory_space<vmem>>, vector<1x1x16x128xf32>
    %8 = vector.shape_cast %7 : vector<1x1x16x128xf32> to vector<16x128xf32>
    %9 = vector.shape_cast %6 : vector<16x128xf32> to vector<1x1x16x128xf32>
    tpu.vector_store %arg5[%c0_9, %c0_10, %c0_11, %c0_12], %9 {strides = array<i32>} : memref<1x2x16x128xf32, #tpu.memory_space<vmem>>, vector<1x1x16x128xf32>,
    %c0_13 = arith.constant 0 : index
    %c0_14 = arith.constant 0 : index
    %c0_15 = arith.constant 0 : index
    %10 = vector.load %arg3[%c0_13, %c0_14, %c0_15] : memref<1x16x256xf32, #tpu.memory_space<vmem>>, vector<1x16x128xf32>
    %11 = vector.shape_cast %10 : vector<1x16x128xf32> to vector<16x128xf32>
    %c0_16 = arith.constant 0 : index
    %c0_17 = arith.constant 0 : index
    %c0_18 = arith.constant 0 : index
    %c0_19 = arith.constant 0 : index
    %12 = vector.load %arg6[%c0_16, %c0_17, %c0_18, %c0_19] : memref<1x2x16x128xf32, #tpu.memory_space<vmem>>, vector<1x1x16x128xf32>
    %13 = vector.shape_cast %12 : vector<1x1x16x128xf32> to vector<16x128xf32>
    %14 = vector.shape_cast %11 : vector<16x128xf32> to vector<1x1x16x128xf32>
    tpu.vector_store %arg6[%c0_16, %c0_17, %c0_18, %c0_19], %14 {strides = array<i32>} : memref<1x2x16x128xf32, #tpu.memory_space<vmem>>, vector<1x1x16x128xf32>,
    %c0_20 = arith.constant 0 : index
    %c0_21 = arith.constant 0 : index
    %c128 = arith.constant 128 : index
    %15 = vector.load %arg1[%c0_20, %c0_21, %c128] : memref<1x8x256xf32, #tpu.memory_space<vmem>>, vector<1x8x128xf32>
    %16 = vector.shape_cast %15 : vector<1x8x128xf32> to vector<8x128xf32>
    %c0_22 = arith.constant 0 : index
    %c1 = arith.constant 1 : index
    %c0_23 = arith.constant 0 : index
    %c0_24 = arith.constant 0 : index
    %17 = vector.load %arg4[%c0_22, %c1, %c0_23, %c0_24] : memref<1x2x8x128xf32, #tpu.memory_space<vmem>>, vector<1x1x8x128xf32>
    %18 = vector.shape_cast %17 : vector<1x1x8x128xf32> to vector<8x128xf32>
    %19 = vector.shape_cast %16 : vector<8x128xf32> to vector<1x1x8x128xf32>
    tpu.vector_store %arg4[%c0_22, %c1, %c0_23, %c0_24], %19 {strides = array<i32>} : memref<1x2x8x128xf32, #tpu.memory_space<vmem>>, vector<1x1x8x128xf32>,
    %c0_25 = arith.constant 0 : index
    %c0_26 = arith.constant 0 : index
    %c128_27 = arith.constant 128 : index
    %20 = vector.load %arg2[%c0_25, %c0_26, %c128_27] : memref<1x16x256xf32, #tpu.memory_space<vmem>>, vector<1x16x128xf32>
    %21 = vector.shape_cast %20 : vector<1x16x128xf32> to vector<16x128xf32>
    %c0_28 = arith.constant 0 : index
    %c1_29 = arith.constant 1 : index
    %c0_30 = arith.constant 0 : index
    %c0_31 = arith.constant 0 : index
    %22 = vector.load %arg5[%c0_28, %c1_29, %c0_30, %c0_31] : memref<1x2x16x128xf32, #tpu.memory_space<vmem>>, vector<1x1x16x128xf32>
    %23 = vector.shape_cast %22 : vector<1x1x16x128xf32> to vector<16x128xf32>
    %24 = vector.shape_cast %21 : vector<16x128xf32> to vector<1x1x16x128xf32>
    tpu.vector_store %arg5[%c0_28, %c1_29, %c0_30, %c0_31], %24 {strides = array<i32>} : memref<1x2x16x128xf32, #tpu.memory_space<vmem>>, vector<1x1x16x128xf32>,
    %c0_32 = arith.constant 0 : index
    %c0_33 = arith.constant 0 : index
    %c128_34 = arith.constant 128 : index
    %25 = vector.load %arg3[%c0_32, %c0_33, %c128_34] : memref<1x16x256xf32, #tpu.memory_space<vmem>>, vector<1x16x128xf32>
    %26 = vector.shape_cast %25 : vector<1x16x128xf32> to vector<16x128xf32>
    %c0_35 = arith.constant 0 : index
    %c1_36 = arith.constant 1 : index
    %c0_37 = arith.constant 0 : index
    %c0_38 = arith.constant 0 : index
    %27 = vector.load %arg6[%c0_35, %c1_36, %c0_37, %c0_38] : memref<1x2x16x128xf32, #tpu.memory_space<vmem>>, vector<1x1x16x128xf32>
    %28 = vector.shape_cast %27 : vector<1x1x16x128xf32> to vector<16x128xf32>
    %29 = vector.shape_cast %26 : vector<16x128xf32> to vector<1x1x16x128xf32>
    tpu.vector_store %arg6[%c0_35, %c1_36, %c0_37, %c0_38], %29 {strides = array<i32>} : memref<1x2x16x128xf32, #tpu.memory_space<vmem>>, vector<1x1x16x128xf32>,
    return
  }
  func.func @transform_0(%arg0: i32) -> (i32, i32, i32) {
    %c0_i32 = arith.constant 0 : i32
    %c0_i32_0 = arith.constant 0 : i32
    %c0_i32_1 = arith.constant 0 : i32
    return %arg0, %c0_i32, %c0_i32_0 : i32, i32, i32
  }
  func.func @transform_1(%arg0: i32) -> (i32, i32, i32) {
    %c0_i32 = arith.constant 0 : i32
    %c0_i32_0 = arith.constant 0 : i32
    %c0_i32_1 = arith.constant 0 : i32
    return %arg0, %c0_i32, %c0_i32_0 : i32, i32, i32
  }
  func.func @transform_2(%arg0: i32) -> (i32, i32, i32) {
    %c0_i32 = arith.constant 0 : i32
    %c0_i32_0 = arith.constant 0 : i32
    %c0_i32_1 = arith.constant 0 : i32
    return %arg0, %c0_i32, %c0_i32_0 : i32, i32, i32
  }
  func.func @transform_3(%arg0: i32) -> (i32, i32, i32, i32) {
    %c0_i32 = arith.constant 0 : i32
    %c0_i32_0 = arith.constant 0 : i32
    %c0_i32_1 = arith.constant 0 : i32
    %c0_i32_2 = arith.constant 0 : i32
    return %arg0, %c0_i32, %c0_i32_0, %c0_i32_1 : i32, i32, i32, i32
  }
  func.func @transform_4(%arg0: i32) -> (i32, i32, i32, i32) {
    %c0_i32 = arith.constant 0 : i32
    %c0_i32_0 = arith.constant 0 : i32
    %c0_i32_1 = arith.constant 0 : i32
    %c0_i32_2 = arith.constant 0 : i32
    return %arg0, %c0_i32, %c0_i32_0, %c0_i32_1 : i32, i32, i32, i32
  }
  func.func @transform_5(%arg0: i32) -> (i32, i32, i32, i32) {
    %c0_i32 = arith.constant 0 : i32
    %c0_i32_0 = arith.constant 0 : i32
    %c0_i32_1 = arith.constant 0 : i32
    %c0_i32_2 = arith.constant 0 : i32
    return %arg0, %c0_i32, %c0_i32_0, %c0_i32_1 : i32, i32, i32, i32
  }
}

</mosaic_0001>

<llo_original>
// kernel: tpu_custom_call.1
$region0: #{tpu_custom_call.1}
  #allocation0 [shape = 'u32[]', space=smem, size = 0x4, offset = 0x4, fixed_abs, tag = 'smem constant byte address 0x4 - core index']
  #allocation1 [shape = 'u32[144,128]{1,0:T(1,128)}', space=vmem, size = 0x12000, scoped, tag = 'internal scratch']
  %s0 = inlined_call_operand.hbm [shape: f32[2,8,256], index: 0, kind: input, shape index: {}]
  %s1 = inlined_call_operand.hbm [shape: f32[2,16,256], index: 1, kind: input, shape index: {}]
  %s2 = inlined_call_operand.hbm [shape: f32[2,16,256], index: 2, kind: input, shape index: {}]
  %s3 = inlined_call_operand.hbm [shape: f32[2,2,8,128], index: 3, kind: output, shape index: {0}]
  %s4 = inlined_call_operand.hbm [shape: f32[2,2,16,128], index: 4, kind: output, shape index: {1}]
  %s5 = inlined_call_operand.hbm [shape: f32[2,2,16,128], index: 5, kind: output, shape index: {2}]
  %6 = xla_tuple %s3, %s4, %s5
  %s7 = sld [smem:[#allocation0]]
  $region73: #{tpu_custom_call.1} parent=0
    _
  %s9 = ssub.s32 1, %s7
  %s10 = scalar_select 0, %s9, %s7
  $region1: #{tpu_custom_call.1} parent=0
    #allocation2 [shape = 'u8[16384]{0}', space=vmem, size = 0x4000, scoped, tag = 'input window, operand 0']
    #allocation3 [shape = 's32[2]{0}', space=sflag, size = 0x8, scoped, tag = 'scoped memory for tpu_custom_call.1']
    #allocation4 [shape = 's32[2]{0}', space=sflag, size = 0x8, scoped, tag = 'scoped memory for tpu_custom_call.1']
    #allocation5 [shape = 'u8[32768]{0}', space=vmem, size = 0x8000, scoped, tag = 'input window, operand 1']
    #allocation6 [shape = 's32[2]{0}', space=sflag, size = 0x8, scoped, tag = 'scoped memory for tpu_custom_call.1']
    #allocation7 [shape = 'u8[32768]{0}', space=vmem, size = 0x8000, scoped, tag = 'input window, operand 2']
    #allocation8 [shape = 'u8[16384]{0}', space=vmem, size = 0x4000, scoped, tag = 'output window, operand 0']
    #allocation9 [shape = 'u8[32768]{0}', space=vmem, size = 0x8000, scoped, tag = 'output window, operand 1']
    #allocation10 [shape = 's32[2]{0}', space=sflag, size = 0x8, scoped, tag = 'scoped memory for tpu_custom_call.1']
    #allocation11 [shape = 'u8[32768]{0}', space=vmem, size = 0x8000, scoped, tag = 'output window, operand 2']
    %11 = vsyncpa [#allocation3], 0
    %s12 = scalar_lea.sflag [#allocation3], 1
    %13 = vsyncpa %s12, 0
    %14 = vsyncpa [#allocation6], 0
    %s15 = scalar_lea.sflag [#allocation6], 1
    %16 = vsyncpa %s15, 0
    %17 = vsyncpa [#allocation4], 0
    %s18 = scalar_lea.sflag [#allocation4], 1
    %19 = vsyncpa %s18, 0
    %20 = vsyncpa [#allocation10], 0
    %s21 = scalar_lea.sflag [#allocation10], 1
    %22 = vsyncpa %s21, 0
    loop: start=0, step=1, limit=4
    $region2: #{tpu_custom_call.1} parent=1 // loop_pre_header
      _
    $region3: #{tpu_custom_call.1} parent=1 // loop_header
      %s24 = sphi 0, %s28
      %p25 = scmp.ge.s32.totalorder %s24, 4
      %s34 = sphi 0, %s36
      %s37 = sphi 0, %s34
      %s38 = sphi 0, %s37
      %s54 = sphi 0, %s38
      %s60 = sphi 0, %s62
      %s63 = sphi 0, %s60
      %s64 = sphi 0, %s63
      %s80 = sphi 0, %s64
      %s86 = sphi 0, %s88
      %s89 = sphi 0, %s86
      %s90 = sphi 0, %s89
      %s106 = sphi 0, %s90
      %s112 = sphi 0, %s114
      %s115 = sphi 0, %s112
      %s116 = sphi 0, %s115
      %s132 = sphi 0, %s116
      %s138 = sphi 0, %s140
      %s141 = sphi 0, %s138
      %s142 = sphi 0, %s141
      %s158 = sphi 0, %s142
      %s164 = sphi 0, %s166
      %s167 = sphi 0, %s164
      %s168 = sphi 0, %s167
      %s184 = sphi 0, %s168
    $region4: #{tpu_custom_call.1} parent=1 // loop_header_branch
      %27 = sbr.rel (%p25) target = $region8
    $region5: #{tpu_custom_call.1} parent=1 // loop_body
      %s29 = ssub.s32 %s24, 1
      %s30 = ssub.s32 %s24, 2
      %s31 = sadd.s32 %s24, 1
      %s32 = ssub.s32 %s24, %s31
      %p33 = scmp.eq.s32.totalorder %s32, 0
      %s35 = sadd.s32 %s34, 1
      %s36 = scalar_select %p33, %s34, %s35
      %p39 = pneg %p33
      %p40 = scmp.eq.s32.totalorder %s24, 1
      %p41 = por %p39, %p40
      %p42 = scmp.ne.s32.totalorder %s34, %s37
      %p43 = scmp.eq.s32.totalorder %s24, 0
      %p44 = por %p42, %p43
      %p45 = scmp.ne.s32.totalorder %s34, %s37
      %p46 = scmp.eq.s32.totalorder %s29, 1
      %p47 = por %p45, %p46
      %p48 = scmp.ne.s32.totalorder %s37, %s38
      %p49 = scmp.eq.s32.totalorder %s29, 0
      %p50 = por %p48, %p49
      %p51 = scmp.ne.s32.totalorder %s37, %s38
      %p52 = scmp.eq.s32.totalorder %s30, 1
      %p53 = por %p51, %p52
      %p55 = scmp.ne.s32.totalorder %s38, %s54
      %p56 = scmp.eq.s32.totalorder %s30, 0
      %p57 = por %p55, %p56
      %s58 = ssub.s32 %s24, %s31
      %p59 = scmp.eq.s32.totalorder %s58, 0
      %s61 = sadd.s32 %s60, 1
      %s62 = scalar_select %p59, %s60, %s61
      %p65 = pneg %p59
      %p66 = scmp.eq.s32.totalorder %s24, 1
      %p67 = por %p65, %p66
      %p68 = scmp.ne.s32.totalorder %s60, %s63
      %p69 = scmp.eq.s32.totalorder %s24, 0
      %p70 = por %p68, %p69
      %p71 = scmp.ne.s32.totalorder %s60, %s63
      %p72 = scmp.eq.s32.totalorder %s29, 1
      %p73 = por %p71, %p72
      %p74 = scmp.ne.s32.totalorder %s63, %s64
      %p75 = scmp.eq.s32.totalorder %s29, 0
      %p76 = por %p74, %p75
      %p77 = scmp.ne.s32.totalorder %s63, %s64
      %p78 = scmp.eq.s32.totalorder %s30, 1
      %p79 = por %p77, %p78
      %p81 = scmp.ne.s32.totalorder %s64, %s80
      %p82 = scmp.eq.s32.totalorder %s30, 0
      %p83 = por %p81, %p82
      %s84 = ssub.s32 %s24, %s31
      %p85 = scmp.eq.s32.totalorder %s84, 0
      %s87 = sadd.s32 %s86, 1
      %s88 = scalar_select %p85, %s86, %s87
      %p91 = pneg %p85
      %p92 = scmp.eq.s32.totalorder %s24, 1
      %p93 = por %p91, %p92
      %p94 = scmp.ne.s32.totalorder %s86, %s89
      %p95 = scmp.eq.s32.totalorder %s24, 0
      %p96 = por %p94, %p95
      %p97 = scmp.ne.s32.totalorder %s86, %s89
      %p98 = scmp.eq.s32.totalorder %s29, 1
      %p99 = por %p97, %p98
      %p100 = scmp.ne.s32.totalorder %s89, %s90
      %p101 = scmp.eq.s32.totalorder %s29, 0
      %p102 = por %p100, %p101
      %p103 = scmp.ne.s32.totalorder %s89, %s90
      %p104 = scmp.eq.s32.totalorder %s30, 1
      %p105 = por %p103, %p104
      %p107 = scmp.ne.s32.totalorder %s90, %s106
      %p108 = scmp.eq.s32.totalorder %s30, 0
      %p109 = por %p107, %p108
      %s110 = ssub.s32 %s24, %s31
      %p111 = scmp.eq.s32.totalorder %s110, 0
      %s113 = sadd.s32 %s112, 1
      %s114 = scalar_select %p111, %s112, %s113
      %p117 = pneg %p111
      %p118 = scmp.eq.s32.totalorder %s24, 1
      %p119 = por %p117, %p118
      %p120 = scmp.ne.s32.totalorder %s112, %s115
      %p121 = scmp.eq.s32.totalorder %s24, 0
      %p122 = por %p120, %p121
      %p123 = scmp.ne.s32.totalorder %s112, %s115
      %p124 = scmp.eq.s32.totalorder %s29, 1
      %p125 = por %p123, %p124
      %p126 = scmp.ne.s32.totalorder %s115, %s116
      %p127 = scmp.eq.s32.totalorder %s29, 0
      %p128 = por %p126, %p127
      %p129 = scmp.ne.s32.totalorder %s115, %s116
      %p130 = scmp.eq.s32.totalorder %s30, 1
      %p131 = por %p129, %p130
      %p133 = scmp.ne.s32.totalorder %s116, %s132
      %p134 = scmp.eq.s32.totalorder %s30, 0
      %p135 = por %p133, %p134
      %s136 = ssub.s32 %s24, %s31
      %p137 = scmp.eq.s32.totalorder %s136, 0
      %s139 = sadd.s32 %s138, 1
      %s140 = scalar_select %p137, %s138, %s139
      %p143 = pneg %p137
      %p144 = scmp.eq.s32.totalorder %s24, 1
      %p145 = por %p143, %p144
      %p146 = scmp.ne.s32.totalorder %s138, %s141
      %p147 = scmp.eq.s32.totalorder %s24, 0
      %p148 = por %p146, %p147
      %p149 = scmp.ne.s32.totalorder %s138, %s141
      %p150 = scmp.eq.s32.totalorder %s29, 1
      %p151 = por %p149, %p150
      %p152 = scmp.ne.s32.totalorder %s141, %s142
      %p153 = scmp.eq.s32.totalorder %s29, 0
      %p154 = por %p152, %p153
      %p155 = scmp.ne.s32.totalorder %s141, %s142
      %p156 = scmp.eq.s32.totalorder %s30, 1
      %p157 = por %p155, %p156
      %p159 = scmp.ne.s32.totalorder %s142, %s158
      %p160 = scmp.eq.s32.totalorder %s30, 0
      %p161 = por %p159, %p160
      %s162 = ssub.s32 %s24, %s31
      %p163 = scmp.eq.s32.totalorder %s162, 0
      %s165 = sadd.s32 %s164, 1
      %s166 = scalar_select %p163, %s164, %s165
      %p169 = pneg %p163
      %p170 = scmp.eq.s32.totalorder %s24, 1
      %p171 = por %p169, %p170
      %p172 = scmp.ne.s32.totalorder %s164, %s167
      %p173 = scmp.eq.s32.totalorder %s24, 0
      %p174 = por %p172, %p173
      %p175 = scmp.ne.s32.totalorder %s164, %s167
      %p176 = scmp.eq.s32.totalorder %s29, 1
      %p177 = por %p175, %p176
      %p178 = scmp.ne.s32.totalorder %s167, %s168
      %p179 = scmp.eq.s32.totalorder %s29, 0
      %p180 = por %p178, %p179
      %p181 = scmp.ne.s32.totalorder %s167, %s168
      %p182 = scmp.eq.s32.totalorder %s30, 1
      %p183 = por %p181, %p182
      %p185 = scmp.ne.s32.totalorder %s168, %s184
      %p186 = scmp.eq.s32.totalorder %s30, 0
      %p187 = por %p185, %p186
      %p188 = scmp.le.s32.totalorder 1, %s24
      %p189 = scmp.lt.s32.totalorder %s24, 3
      %p190 = pnand %p188, %p189
      %p191 = pneg %p190
      // Predicated region
      $region9: #{tpu_custom_call.1} parent=5 // pred_check
        _
      $region10: #{tpu_custom_call.1} parent=5 // pred_check_branch
        %193 = sbr.rel (%p190) target = $region12
      $region11: #{tpu_custom_call.1} parent=5 // pred_region
        %s194 = ssub.s32 %s24, 1
      $region12: #{tpu_custom_call.1} parent=5 // pred_fallthru
        _
      %p195 = scmp.lt.s32.totalorder %s24, 2
      // Predicated region
      $region13: #{tpu_custom_call.1} parent=5 // pred_check
        %p196 = pneg %p195
      $region14: #{tpu_custom_call.1} parent=5 // pred_check_branch
        %198 = sbr.rel (%p196) target = $region16
      $region15: #{tpu_custom_call.1} parent=5 // pred_region
        // Predicated region
        $region17: #{tpu_custom_call.1} parent=15 // pred_check
          %p199 = pneg %p44
        $region18: #{tpu_custom_call.1} parent=15 // pred_check_branch
          %201 = sbr.rel (%p199) target = $region20
        $region19: #{tpu_custom_call.1} parent=15 // pred_region
          %s202 = sand.u32 %s34, 1
          %s203 = scalar_lea.sflag [#allocation3], %s202
          %s204 = sand.u32 %s34, 1
          %s205 = smul.addr %s204, 16
          %s206 = scalar_lea.vmem [#allocation2], %s205
          %s208 = ssub.s32 256, 256
          %209 = vsyncadd %s203, %s208
          %s210 = smul.addr %s24, 2
          %s211 = smul.addr %s210, 128
          %s212 = scalar_lea.hbm %s0, %s211
          %s214 = sshll.u32 %s206, 4
          %s215 = int_to_ptr.vmem [resolvable:$true] %s214
          %217 = dma.hbm_to_vmem [thread:$0]  %s212, 256, %s215, %s203
        $region20: #{tpu_custom_call.1} parent=15 // pred_fallthru
          _
        // Predicated region
        $region21: #{tpu_custom_call.1} parent=15 // pred_check
          %p218 = pneg %p70
        $region22: #{tpu_custom_call.1} parent=15 // pred_check_branch
          %220 = sbr.rel (%p218) target = $region24
        $region23: #{tpu_custom_call.1} parent=15 // pred_region
          %s221 = sand.u32 %s24, 1
          %s222 = scalar_lea.sflag [#allocation6], %s221
          %s223 = sand.u32 %s60, 1
          %s224 = smul.addr %s223, 32
          %s225 = scalar_lea.vmem [#allocation5], %s224
          %s227 = ssub.s32 512, 512
          %228 = vsyncadd %s222, %s227
          %s229 = smul.addr %s24, 4
          %s230 = smul.addr %s229, 128
          %s231 = scalar_lea.hbm %s1, %s230
          %s232 = sshll.u32 %s225, 4
          %s233 = int_to_ptr.vmem [resolvable:$true] %s232
          %238 = dma.hbm_to_vmem [thread:$0]  %s231, 512, %s233, %s222, 256, 256, 16
        $region24: #{tpu_custom_call.1} parent=15 // pred_fallthru
          _
        // Predicated region
        $region25: #{tpu_custom_call.1} parent=15 // pred_check
          %p239 = pneg %p96
        $region26: #{tpu_custom_call.1} parent=15 // pred_check_branch
          %241 = sbr.rel (%p239) target = $region28
        $region27: #{tpu_custom_call.1} parent=15 // pred_region
          %s242 = sand.u32 %s24, 1
          %s243 = scalar_lea.sflag [#allocation6], %s242
          %s244 = sand.u32 %s86, 1
          %s245 = smul.addr %s244, 32
          %s246 = scalar_lea.vmem [#allocation7], %s245
          %s248 = ssub.s32 512, 512
          %249 = vsyncadd %s243, %s248
          %s250 = smul.addr %s24, 4
          %s251 = smul.addr %s250, 128
          %s252 = scalar_lea.hbm %s2, %s251
          %s253 = sshll.u32 %s246, 4
          %s254 = int_to_ptr.vmem [resolvable:$true] %s253
          %259 = dma.hbm_to_vmem [thread:$0]  %s252, 512, %s254, %s243, 256, 256, 16
        $region28: #{tpu_custom_call.1} parent=15 // pred_fallthru
          _
      $region16: #{tpu_custom_call.1} parent=5 // pred_fallthru
        _
      %p260 = scmp.le.s32.totalorder 1, %s24
      %p261 = scmp.lt.s32.totalorder %s24, 3
      %p262 = pnand %p260, %p261
      %p263 = pneg %p262
      // Predicated region
      $region29: #{tpu_custom_call.1} parent=5 // pred_check
        _
      $region30: #{tpu_custom_call.1} parent=5 // pred_check_branch
        %265 = sbr.rel (%p262) target = $region32
      $region31: #{tpu_custom_call.1} parent=5 // pred_region
        %s266 = ssub.s32 %s24, 1
        %s267 = sand.u32 %s37, 1
        %s268 = scalar_lea.sflag [#allocation3], %s267
        %s269 = sand.u32 %s37, 1
        %s270 = smul.addr %s269, 16
        %s271 = scalar_lea.vmem [#allocation2], %s270
        // Predicated region
        $region33: #{tpu_custom_call.1} parent=31 // pred_check
          %p272 = pneg %p50
        $region34: #{tpu_custom_call.1} parent=31 // pred_check_branch
          %274 = sbr.rel (%p272) target = $region36
        $region35: #{tpu_custom_call.1} parent=31 // pred_region
          %275 = dma.done %s268, 256
        $region36: #{tpu_custom_call.1} parent=31 // pred_fallthru
          _
        %s276 = sand.u32 %s29, 1
        %s277 = scalar_lea.sflag [#allocation6], %s276
        %s278 = sand.u32 %s63, 1
        %s279 = smul.addr %s278, 32
        %s280 = scalar_lea.vmem [#allocation5], %s279
        // Predicated region
        $region37: #{tpu_custom_call.1} parent=31 // pred_check
          %p281 = pneg %p76
        $region38: #{tpu_custom_call.1} parent=31 // pred_check_branch
          %283 = sbr.rel (%p281) target = $region40
        $region39: #{tpu_custom_call.1} parent=31 // pred_region
          %284 = dma.done %s277, 512
        $region40: #{tpu_custom_call.1} parent=31 // pred_fallthru
          _
        %s285 = sand.u32 %s29, 1
        %s286 = scalar_lea.sflag [#allocation6], %s285
        %s287 = sand.u32 %s89, 1
        %s288 = smul.addr %s287, 32
        %s289 = scalar_lea.vmem [#allocation7], %s288
        // Predicated region
        $region41: #{tpu_custom_call.1} parent=31 // pred_check
          %p290 = pneg %p102
        $region42: #{tpu_custom_call.1} parent=31 // pred_check_branch
          %292 = sbr.rel (%p290) target = $region44
        $region43: #{tpu_custom_call.1} parent=31 // pred_region
          %293 = dma.done %s286, 512
        $region44: #{tpu_custom_call.1} parent=31 // pred_fallthru
          _
        %s294 = sand.u32 %s37, 1
        %s295 = scalar_lea.sflag [#allocation3], %s294
        %s296 = sand.u32 %s37, 1
        %s297 = smul.addr %s296, 16
        %s298 = scalar_lea.vmem [#allocation2], %s297
        %p299 = pneg %p50
        %p300 = pneg %p47
        %s301 = sand.u32 %s29, 1
        %s302 = scalar_lea.sflag [#allocation6], %s301
        %s303 = sand.u32 %s63, 1
        %s304 = smul.addr %s303, 32
        %s305 = scalar_lea.vmem [#allocation5], %s304
        %p306 = pneg %p76
        %p307 = pneg %p73
        %s308 = sand.u32 %s29, 1
        %s309 = scalar_lea.sflag [#allocation6], %s308
        %s310 = sand.u32 %s89, 1
        %s311 = smul.addr %s310, 32
        %s312 = scalar_lea.vmem [#allocation7], %s311
        %p313 = pneg %p102
        %p314 = pneg %p99
        %p315 = pneg %p128
        %p316 = pneg %p125
        %s317 = sand.u32 %s115, 1
        %s318 = scalar_lea.sflag [#allocation4], %s317
        %s319 = sand.u32 %s115, 1
        %s320 = smul.addr %s319, 16
        %s321 = scalar_lea.vmem [#allocation8], %s320
        %p322 = pneg %p154
        %p323 = pneg %p151
        %s324 = sand.u32 %s29, 1
        %s325 = scalar_lea.sflag [#allocation10], %s324
        %s326 = sand.u32 %s141, 1
        %s327 = smul.addr %s326, 32
        %s328 = scalar_lea.vmem [#allocation9], %s327
        %p329 = pneg %p180
        %p330 = pneg %p177
        %s331 = sand.u32 %s29, 1
        %s332 = scalar_lea.sflag [#allocation10], %s331
        %s333 = sand.u32 %s167, 1
        %s334 = smul.addr %s333, 32
        %s335 = scalar_lea.vmem [#allocation11], %s334
        %v336 = vld [vmem:[%s271] sm:$0xff]
        %337 = vst [vmem:[%s321] sm:$0xff] %v336
        %v338 = vld [vmem:[%s280] sm:$0xff]
        %v339 = vld [vmem:[%s280 + $0x10] sm:$0xff]
        %340 = vst [vmem:[%s328] sm:$0xff] %v338
        %341 = vst [vmem:[%s328 + $0x8] sm:$0xff] %v339
        %v342 = vld [vmem:[%s289] sm:$0xff]
        %v343 = vld [vmem:[%s289 + $0x10] sm:$0xff]
        %344 = vst [vmem:[%s335] sm:$0xff] %v342
        %345 = vst [vmem:[%s335 + $0x8] sm:$0xff] %v343
        %v346 = vld [vmem:[%s271 + $0x8] sm:$0xff]
        %s347 = scalar_lea.vmem %s321, 8 [#allocation8]
        %348 = vst [vmem:[%s347] sm:$0xff] %v346
        %v349 = vld [vmem:[%s280 + $0x8] sm:$0xff]
        %v350 = vld [vmem:[%s280 + $0x18] sm:$0xff]
        %s351 = scalar_lea.vmem %s328, 16 [#allocation9]
        %352 = vst [vmem:[%s351] sm:$0xff] %v349
        %353 = vst [vmem:[%s351 + $0x8] sm:$0xff] %v350
        %v354 = vld [vmem:[%s289 + $0x8] sm:$0xff]
        %v355 = vld [vmem:[%s289 + $0x18] sm:$0xff]
        %s356 = scalar_lea.vmem %s335, 16 [#allocation11]
        %357 = vst [vmem:[%s356] sm:$0xff] %v354
        %358 = vst [vmem:[%s356 + $0x8] sm:$0xff] %v355
        %s359 = sand.u32 %s115, 1
        %s360 = scalar_lea.sflag [#allocation4], %s359
        %s361 = sand.u32 %s115, 1
        %s362 = smul.addr %s361, 16
        %s363 = scalar_lea.vmem [#allocation8], %s362
        %s364 = sand.u32 %s29, 1
        %s365 = scalar_lea.sflag [#allocation10], %s364
        %s366 = sand.u32 %s141, 1
        %s367 = smul.addr %s366, 32
        %s368 = scalar_lea.vmem [#allocation9], %s367
        %s369 = sand.u32 %s29, 1
        %s370 = scalar_lea.sflag [#allocation10], %s369
        %s371 = sand.u32 %s167, 1
        %s372 = smul.addr %s371, 32
        %s373 = scalar_lea.vmem [#allocation11], %s372
        // Predicated region
        $region45: #{tpu_custom_call.1} parent=31 // pred_check
          %p374 = pneg %p125
        $region46: #{tpu_custom_call.1} parent=31 // pred_check_branch
          %376 = sbr.rel (%p374) target = $region48
        $region47: #{tpu_custom_call.1} parent=31 // pred_region
          %s378 = ssub.s32 256, 256
          %379 = vsyncadd %s360, %s378
          %s380 = smul.addr %s29, 2
          %s381 = smul.addr %s380, 128
          %s382 = scalar_lea.hbm %s3, %s381
          %s383 = sshll.u32 %s363, 4
          %s384 = int_to_ptr.vmem [resolvable:$true] %s383
          %389 = dma.vmem_to_hbm [thread:$0]  %s384, 256, %s382, %s360, 128, 128, 8
        $region48: #{tpu_custom_call.1} parent=31 // pred_fallthru
          _
        // Predicated region
        $region49: #{tpu_custom_call.1} parent=31 // pred_check
          %p390 = pneg %p151
        $region50: #{tpu_custom_call.1} parent=31 // pred_check_branch
          %392 = sbr.rel (%p390) target = $region52
        $region51: #{tpu_custom_call.1} parent=31 // pred_region
          %s394 = ssub.s32 512, 512
          %395 = vsyncadd %s365, %s394
          %s396 = smul.addr %s29, 4
          %s397 = smul.addr %s396, 128
          %s398 = scalar_lea.hbm %s4, %s397
          %s399 = sshll.u32 %s368, 4
          %s400 = int_to_ptr.vmem [resolvable:$true] %s399
          %405 = dma.vmem_to_hbm [thread:$0]  %s400, 512, %s398, %s365, 128, 128, 8
        $region52: #{tpu_custom_call.1} parent=31 // pred_fallthru
          _
        // Predicated region
        $region53: #{tpu_custom_call.1} parent=31 // pred_check
          %p406 = pneg %p177
        $region54: #{tpu_custom_call.1} parent=31 // pred_check_branch
          %408 = sbr.rel (%p406) target = $region56
        $region55: #{tpu_custom_call.1} parent=31 // pred_region
          %s410 = ssub.s32 512, 512
          %411 = vsyncadd %s370, %s410
          %s412 = smul.addr %s29, 4
          %s413 = smul.addr %s412, 128
          %s414 = scalar_lea.hbm %s5, %s413
          %s415 = sshll.u32 %s373, 4
          %s416 = int_to_ptr.vmem [resolvable:$true] %s415
          %421 = dma.vmem_to_hbm [thread:$0]  %s416, 512, %s414, %s370, 128, 128, 8
        $region56: #{tpu_custom_call.1} parent=31 // pred_fallthru
          _
      $region32: #{tpu_custom_call.1} parent=5 // pred_fallthru
        _
      %p422 = scmp.le.s32.totalorder 2, %s24
      // Predicated region
      $region57: #{tpu_custom_call.1} parent=5 // pred_check
        %p423 = pneg %p422
      $region58: #{tpu_custom_call.1} parent=5 // pred_check_branch
        %425 = sbr.rel (%p423) target = $region60
      $region59: #{tpu_custom_call.1} parent=5 // pred_region
        %s426 = ssub.s32 %s24, 2
        // Predicated region
        $region61: #{tpu_custom_call.1} parent=59 // pred_check
          %p427 = pneg %p131
        $region62: #{tpu_custom_call.1} parent=59 // pred_check_branch
          %429 = sbr.rel (%p427) target = $region64
        $region63: #{tpu_custom_call.1} parent=59 // pred_region
          %s430 = sand.u32 %s116, 1
          %s431 = scalar_lea.sflag [#allocation4], %s430
          %s432 = sand.u32 %s116, 1
          %s433 = smul.addr %s432, 16
          %s434 = scalar_lea.vmem [#allocation8], %s433
          %435 = dma.done %s431, 256
        $region64: #{tpu_custom_call.1} parent=59 // pred_fallthru
          _
        // Predicated region
        $region65: #{tpu_custom_call.1} parent=59 // pred_check
          %p436 = pneg %p157
        $region66: #{tpu_custom_call.1} parent=59 // pred_check_branch
          %438 = sbr.rel (%p436) target = $region68
        $region67: #{tpu_custom_call.1} parent=59 // pred_region
          %s439 = sand.u32 %s30, 1
          %s440 = scalar_lea.sflag [#allocation10], %s439
          %s441 = sand.u32 %s142, 1
          %s442 = smul.addr %s441, 32
          %s443 = scalar_lea.vmem [#allocation9], %s442
          %444 = dma.done %s440, 512
        $region68: #{tpu_custom_call.1} parent=59 // pred_fallthru
          _
        // Predicated region
        $region69: #{tpu_custom_call.1} parent=59 // pred_check
          %p445 = pneg %p183
        $region70: #{tpu_custom_call.1} parent=59 // pred_check_branch
          %447 = sbr.rel (%p445) target = $region72
        $region71: #{tpu_custom_call.1} parent=59 // pred_region
          %s448 = sand.u32 %s30, 1
          %s449 = scalar_lea.sflag [#allocation10], %s448
          %s450 = sand.u32 %s168, 1
          %s451 = smul.addr %s450, 32
          %s452 = scalar_lea.vmem [#allocation11], %s451
          %453 = dma.done %s449, 512
        $region72: #{tpu_custom_call.1} parent=59 // pred_fallthru
          _
      $region60: #{tpu_custom_call.1} parent=5 // pred_fallthru
        _
    $region6: #{tpu_custom_call.1} parent=1 // loop_footer
      %s28 = sadd.s32 1, %s24
    $region7: #{tpu_custom_call.1} parent=1 // loop_footer_branch
      %23 = sbr.rel target = $region3
    $region8: #{tpu_custom_call.1} parent=1 // loop_exit
      _
    %454 = vsyncpa [#allocation3], 1
    %s455 = scalar_lea.sflag [#allocation3], 1
    %456 = vsyncpa %s455, 1
    %457 = vsyncpa [#allocation6], 1
    %s458 = scalar_lea.sflag [#allocation6], 1
    %459 = vsyncpa %s458, 1
    %460 = vsyncpa [#allocation4], 1
    %s461 = scalar_lea.sflag [#allocation4], 1
    %462 = vsyncpa %s461, 1
    %463 = vsyncpa [#allocation10], 1
    %s464 = scalar_lea.sflag [#allocation10], 1
    %465 = vsyncpa %s464, 1

</llo_original>
